<compile_context>
chip_gen: v7x
topology: tpu7x:2x2x1
jax: 0.10.0
libtpu: 0.0.40
codegen_flags: <defaults>
</compile_context>

<pallas_src>
import jax
import jax.numpy as jnp
from jax.experimental import pallas as pl
from jax.experimental.pallas import tpu as pltpu


def _round_up(n, m):
    return ((n + m - 1) // m) * m


# ----------------------------- Pallas kernel ------------------------------ #
def sn_discriminator_kernel(x_ref, w1_ref, w2_ref, w3_ref, w4_ref, tail_ref,
                            o_ref):
    f1p = w1_ref.shape[1]
    f2p = w2_ref.shape[1]
    f3p = w3_ref.shape[1]

    # tail rows: 0=b1, 1=b2, 2=b3, 3[col 0]=b4 (f32).  Biases are cast to
    # bf16 once per grid step (bf16 VPU path on v6e/v7x; v5e upconverts).
    b1 = tail_ref[0:1, :f1p].astype(jnp.bfloat16)
    b2 = tail_ref[1:2, :f2p].astype(jnp.bfloat16)
    b3 = tail_ref[2:3, :f3p].astype(jnp.bfloat16)
    b4 = tail_ref[3:4, 0:1]                      # (1, 1) f32 scalar bias

    x = x_ref[...].astype(jnp.bfloat16)          # (TB, ld)

    # fc1 + ReLU (bf16 MXU operands, f32 accumulate, bf16 elementwise chain)
    h = jnp.dot(x, w1_ref[...], preferred_element_type=jnp.float32)
    h = jnp.maximum(h.astype(jnp.bfloat16) + b1, 0.0)

    # fc2 + ReLU
    h = jnp.dot(h, w2_ref[...], preferred_element_type=jnp.float32)
    h = jnp.maximum(h.astype(jnp.bfloat16) + b2, 0.0)

    # fc3 + ReLU
    h = jnp.dot(h, w3_ref[...], preferred_element_type=jnp.float32)
    h = jnp.maximum(h.astype(jnp.bfloat16) + b3, 0.0)

    # fc4: (1, f3p) @ (f3p, TB) -> lane-dense (1, TB) logit row on the MXU
    # (A @ B^T form; the transpose fuses into the matmul).
    z = jnp.dot(w4_ref[...], h.T, preferred_element_type=jnp.float32) + b4

    # sigmoid = 1 / (1 + exp(-z)): exp on EUP, approx reciprocal off the VPU.
    e = jnp.exp(-z)
    sig = pl.reciprocal(1.0 + e, approx=True)

    o_ref[0] = sig.astype(o_ref.dtype)           # (1, TB) packed output row


def _choose_tiles(B, max_tb):
    """Pick (n_tiles, tb): 1-2 big tiles; even grid >= 2 for v7x when B>=512."""
    n = max(1, -(-B // max_tb))
    if B >= 512:
        n = max(n, 2)
    if n > 1 and n % 2 == 1:
        n += 1
    tb = _round_up(-(-B // n), 8)
    return n, tb


def sn_discriminator_forward(x, kernel_params, *, max_block_batch=1024):
    """x: [B, ld] float32.
    kernel_params: (w1 [ld,f1p], w2 [f1p,f2p], w3 [f2p,f3p], w4 [1,f3p]  bf16,
                    tail [8, Pmax] f32)."""
    w1p, w2p, w3p, w4p, tail = kernel_params
    B, ld = x.shape
    assert w1p.shape[0] == ld

    if x.dtype != jnp.float32:
        x = x.astype(jnp.float32)

    n_tiles, tb = _choose_tiles(B, max_block_batch)
    b_pad = n_tiles * tb
    if b_pad > B:                 # only when tb does not divide B
        x = jnp.pad(x, ((0, b_pad - B), (0, 0)))

    f1p, f2p, f3p = w1p.shape[1], w2p.shape[1], w3p.shape[1]
    pmax = tail.shape[1]

    # NOTE: at these sizes VMEM use is ~a few MiB, well under even v5e's
    # 16 MiB scoped default.  For large P on v7x, single-buffer the weight
    # blocks (pipeline_mode=pl.Buffered(1)) and set vmem_limit_bytes.
    out = pl.pallas_call(
        sn_discriminator_kernel,
        out_shape=jax.ShapeDtypeStruct((n_tiles, 1, tb), jnp.float32),
        grid_spec=pltpu.PrefetchScalarGridSpec(
            num_scalar_prefetch=0,
            grid=(n_tiles,),
            in_specs=[
                pl.BlockSpec((tb, ld), lambda i: (i, 0)),     # x: streamed
                pl.BlockSpec((ld, f1p), lambda i: (0, 0)),    # w1: resident
                pl.BlockSpec((f1p, f2p), lambda i: (0, 0)),   # w2: resident
                pl.BlockSpec((f2p, f3p), lambda i: (0, 0)),   # w3: resident
                pl.BlockSpec((1, f3p), lambda i: (0, 0)),     # w4 row
                pl.BlockSpec((8, pmax), lambda i: (0, 0)),    # biases
            ],
            out_specs=pl.BlockSpec((1, 1, tb), lambda i: (i, 0, 0)),
        ),
        compiler_params=pltpu.CompilerParams(
            dimension_semantics=("parallel",)),
    )(x, w1p, w2p, w3p, w4p, tail)

    # Packed (n_tiles, 1, tb) rows -> (B, 1); trivial reshape + slice.
    return out.reshape(-1)[:B].reshape(B, 1)


# --------------------- spectral norm (weight preprocessing) ---------------- #
def spectral_normalize(w_out_in, u, n_power_iterations=1, eps=1e-12):
    """Mirror torch.nn.utils.spectral_norm at forward time.

    w_out_in: [out, in] (PyTorch layout).  u: [out] vector.  Returns W / sigma.
    """
    # TODO(synk): PyTorch keeps `u` persistent across forward calls; here a
    # fresh u + one power iteration is used per initialization.
    w = w_out_in
    v = None
    for _ in range(n_power_iterations):
        v = w.T @ u
        v = v / (jnp.linalg.norm(v) + eps)
        u = w @ v
        u = u / (jnp.linalg.norm(u) + eps)
    sigma = u @ (w @ v)
    return w / sigma


def init_params(key, ld, f1d, f2d, f3d):
    """Returns (kernel_params, ref_params).

    kernel_params: per-layer lane-padded bf16 weights + packed f32 tail.
    ref_params:    unpadded f32 (w[in,out], b) pairs for the pure-JAX reference.
    """
    dims = [(ld, f1d), (f1d, f2d), (f2d, f3d), (f3d, 1)]
    f1p = _round_up(f1d, 128)
    f2p = _round_up(f2d, 128)
    f3p = _round_up(f3d, 128)
    pmax = max(f1p, f2p, f3p)

    ref_params = []
    for i, (fin, fout) in enumerate(dims):
        kw, kb, ku = jax.random.split(jax.random.fold_in(key, i), 3)
        bound = float(fin) ** -0.5  # nn.Linear-style uniform bound
        w_out_in = jax.random.uniform(kw, (fout, fin), jnp.float32, -bound, bound)
        b = jax.random.uniform(kb, (fout,), jnp.float32, -bound, bound)
        u0 = jax.random.normal(ku, (fout,), jnp.float32)
        u0 = u0 / (jnp.linalg.norm(u0) + 1e-12)
        w_sn = spectral_normalize(w_out_in, u0, n_power_iterations=1)
        ref_params += [jnp.asarray(w_sn.T), b]  # [in, out], [out]

    w1, b1, w2, b2, w3, b3, w4, b4 = ref_params

    def pad_to(w, rows, cols):
        return jnp.pad(w, ((0, rows - w.shape[0]), (0, cols - w.shape[1])))

    w1p = pad_to(w1, ld, f1p).astype(jnp.bfloat16)    # (ld,  f1p)
    w2p = pad_to(w2, f1p, f2p).astype(jnp.bfloat16)   # (f1p, f2p)
    w3p = pad_to(w3, f2p, f3p).astype(jnp.bfloat16)   # (f2p, f3p)
    w4p = jnp.pad(w4[:, 0], (0, f3p - f3d)).reshape(1, f3p).astype(jnp.bfloat16)

    tail = jnp.zeros((8, pmax), jnp.float32)
    tail = tail.at[0, :f1d].set(b1)
    tail = tail.at[1, :f2d].set(b2)
    tail = tail.at[2, :f3d].set(b3)
    tail = tail.at[3, 0].set(b4[0])                   # fc4 bias (scalar)

    kernel_params = (w1p, w2p, w3p, w4p, tail)
    return kernel_params, tuple(ref_params)


# ------------------------------ reference --------------------------------- #
def reference_forward(x, ref_params):
    w1, b1, w2, b2, w3, b3, w4, b4 = ref_params
    h = jnp.maximum(x @ w1 + b1, 0.0)
    h = jnp.maximum(h @ w2 + b2, 0.0)
    h = jnp.maximum(h @ w3 + b3, 0.0)
    return jax.nn.sigmoid(h @ w4 + b4)


if __name__ == "__main__":
    # Small shapes consistent with the module's MLP forward; batch 512 gives
    # an even 2-step grid (tb=256) so both v7x TensorCores get a tile.
    batch, ld, f1d, f2d, f3d = 512, 32, 64, 64, 32

    key = jax.random.PRNGKey(0)
    k_x, k_p = jax.random.split(key)

    x = jax.random.normal(k_x, (batch, ld), jnp.float32)
    kernel_params, ref_params = init_params(k_p, ld, f1d, f2d, f3d)

    out = sn_discriminator_forward(x, kernel_params)
    out = jax.block_until_ready(out)

    ref = reference_forward(x, ref_params)
    assert out.shape == (batch, 1)
    assert bool(jnp.all(jnp.isfinite(out)))
    # bf16 MXU operands / bf16 activation chain / approx reciprocal vs pure
    # f32 reference: allow small quantization error.
    max_err = float(jnp.max(jnp.abs(out - ref)))
    assert max_err < 2e-2, max_err

    print("KERNEL_OK")
</pallas_src>

<mosaic_0001>
module attributes {stable_mosaic.version = 11 : i64} {
  func.func @sn_discriminator_kernel(%arg0: i32, %arg1: memref<256x32xf32, #tpu.memory_space<vmem>>, %arg2: memref<32x128xbf16, #tpu.memory_space<vmem>>, %arg3: memref<128x128xbf16, #tpu.memory_space<vmem>>, %arg4: memref<128x128xbf16, #tpu.memory_space<vmem>>, %arg5: memref<1x128xbf16, #tpu.memory_space<vmem>>, %arg6: memref<8x128xf32, #tpu.memory_space<vmem>>, %arg7: memref<1x1x256xf32, #tpu.memory_space<vmem>>) attributes {dimension_semantics = [#tpu.dimension_semantics<parallel>], iteration_bounds = array<i64: 2>, scalar_prefetch = 0 : i64, scratch_operands = 0 : i64, tpu.core_type = #tpu.core_type<tc>, window_params = [{transform_indices = @transform_0, window_bounds = array<i64: 256, 32>}, {pipeline_mode = #tpu.pipeline_mode<synchronous>, transform_indices = @transform_1, window_bounds = array<i64: 32, 128>}, {pipeline_mode = #tpu.pipeline_mode<synchronous>, transform_indices = @transform_2, window_bounds = array<i64: 128, 128>}, {pipeline_mode = #tpu.pipeline_mode<synchronous>, transform_indices = @transform_3, window_bounds = array<i64: 128, 128>}, {pipeline_mode = #tpu.pipeline_mode<synchronous>, transform_indices = @transform_4, window_bounds = array<i64: 1, 128>}, {pipeline_mode = #tpu.pipeline_mode<synchronous>, transform_indices = @transform_5, window_bounds = array<i64: 8, 128>}, {transform_indices = @transform_6, window_bounds = array<i64: 1, 1, 256>}]} {
    %c0 = arith.constant 0 : index
    %c0_0 = arith.constant 0 : index
    %0 = vector.load %arg6[%c0, %c0_0] : memref<8x128xf32, #tpu.memory_space<vmem>>, vector<1x128xf32>
    %1 = arith.truncf %0 : vector<1x128xf32> to vector<1x128xbf16>
    %c1 = arith.constant 1 : index
    %c0_1 = arith.constant 0 : index
    %2 = vector.load %arg6[%c1, %c0_1] : memref<8x128xf32, #tpu.memory_space<vmem>>, vector<1x128xf32>
    %3 = arith.truncf %2 : vector<1x128xf32> to vector<1x128xbf16>
    %c2 = arith.constant 2 : index
    %c0_2 = arith.constant 0 : index
    %4 = vector.load %arg6[%c2, %c0_2] : memref<8x128xf32, #tpu.memory_space<vmem>>, vector<1x128xf32>
    %5 = arith.truncf %4 : vector<1x128xf32> to vector<1x128xbf16>
    %c3 = arith.constant 3 : index
    %c0_3 = arith.constant 0 : index
    %6 = vector.load %arg6[%c3, %c0_3] : memref<8x128xf32, #tpu.memory_space<vmem>>, vector<1x1xf32>
    %c0_4 = arith.constant 0 : index
    %c0_5 = arith.constant 0 : index
    %7 = vector.load %arg1[%c0_4, %c0_5] : memref<256x32xf32, #tpu.memory_space<vmem>>, vector<256x32xf32>
    %8 = arith.truncf %7 : vector<256x32xf32> to vector<256x32xbf16>
    %c0_6 = arith.constant 0 : index
    %c0_7 = arith.constant 0 : index
    %9 = vector.load %arg2[%c0_6, %c0_7] : memref<32x128xbf16, #tpu.memory_space<vmem>>, vector<32x128xbf16>
    %cst = arith.constant dense<0.000000e+00> : vector<256x128xf32>
    %10 = tpu.matmul %8, %9, %cst {dimension_numbers = #tpu.dot_dimension_numbers<[1], [0], [0], [1], [0, 0, 1, 1], [], []>} : vector<256x32xbf16>, vector<32x128xbf16>, vector<256x128xf32> -> vector<256x128xf32>
    %11 = arith.truncf %10 : vector<256x128xf32> to vector<256x128xbf16>
    %12 = vector.broadcast %1 : vector<1x128xbf16> to vector<256x128xbf16>
    %13 = arith.addf %11, %12 : vector<256x128xbf16>
    %cst_8 = arith.constant 0.000000e+00 : bf16
    %14 = vector.broadcast %cst_8 : bf16 to vector<256x128xbf16>
    %15 = arith.maximumf %13, %14 : vector<256x128xbf16>
    %c0_9 = arith.constant 0 : index
    %c0_10 = arith.constant 0 : index
    %16 = vector.load %arg3[%c0_9, %c0_10] : memref<128x128xbf16, #tpu.memory_space<vmem>>, vector<128x128xbf16>
    %cst_11 = arith.constant dense<0.000000e+00> : vector<256x128xf32>
    %17 = tpu.matmul %15, %16, %cst_11 {dimension_numbers = #tpu.dot_dimension_numbers<[1], [0], [0], [1], [0, 0, 1, 1], [], []>} : vector<256x128xbf16>, vector<128x128xbf16>, vector<256x128xf32> -> vector<256x128xf32>
    %18 = arith.truncf %17 : vector<256x128xf32> to vector<256x128xbf16>
    %19 = vector.broadcast %3 : vector<1x128xbf16> to vector<256x128xbf16>
    %20 = arith.addf %18, %19 : vector<256x128xbf16>
    %cst_12 = arith.constant 0.000000e+00 : bf16
    %21 = vector.broadcast %cst_12 : bf16 to vector<256x128xbf16>
    %22 = arith.maximumf %20, %21 : vector<256x128xbf16>
    %c0_13 = arith.constant 0 : index
    %c0_14 = arith.constant 0 : index
    %23 = vector.load %arg4[%c0_13, %c0_14] : memref<128x128xbf16, #tpu.memory_space<vmem>>, vector<128x128xbf16>
    %cst_15 = arith.constant dense<0.000000e+00> : vector<256x128xf32>
    %24 = tpu.matmul %22, %23, %cst_15 {dimension_numbers = #tpu.dot_dimension_numbers<[1], [0], [0], [1], [0, 0, 1, 1], [], []>} : vector<256x128xbf16>, vector<128x128xbf16>, vector<256x128xf32> -> vector<256x128xf32>
    %25 = arith.truncf %24 : vector<256x128xf32> to vector<256x128xbf16>
    %26 = vector.broadcast %5 : vector<1x128xbf16> to vector<256x128xbf16>
    %27 = arith.addf %25, %26 : vector<256x128xbf16>
    %cst_16 = arith.constant 0.000000e+00 : bf16
    %28 = vector.broadcast %cst_16 : bf16 to vector<256x128xbf16>
    %29 = arith.maximumf %27, %28 : vector<256x128xbf16>
    %c0_17 = arith.constant 0 : index
    %c0_18 = arith.constant 0 : index
    %30 = vector.load %arg5[%c0_17, %c0_18] : memref<1x128xbf16, #tpu.memory_space<vmem>>, vector<1x128xbf16>
    %31 = tpu.transpose %29, [1, 0] : vector<256x128xbf16> -> vector<128x256xbf16>
    %cst_19 = arith.constant dense<0.000000e+00> : vector<1x256xf32>
    %32 = tpu.matmul %30, %31, %cst_19 {dimension_numbers = #tpu.dot_dimension_numbers<[1], [0], [0], [1], [0, 0, 1, 1], [], []>} : vector<1x128xbf16>, vector<128x256xbf16>, vector<1x256xf32> -> vector<1x256xf32>
    %33 = vector.broadcast %6 : vector<1x1xf32> to vector<1x256xf32>
    %34 = arith.addf %32, %33 : vector<1x256xf32>
    %cst_20 = arith.constant 0.000000e+00 : f32
    %35 = vector.broadcast %cst_20 : f32 to vector<1x256xf32>
    %36 = arith.subf %35, %34 : vector<1x256xf32>
    %37 = math.exp %36 : vector<1x256xf32>
    %cst_21 = arith.constant 1.000000e+00 : f32
    %38 = vector.broadcast %cst_21 : f32 to vector<1x256xf32>
    %39 = arith.addf %38, %37 : vector<1x256xf32>
    %40 = tpu.reciprocal %39 {approx = true} : vector<1x256xf32> -> vector<1x256xf32>
    %c0_22 = arith.constant 0 : index
    %c0_23 = arith.constant 0 : index
    %c0_24 = arith.constant 0 : index
    %41 = vector.load %arg7[%c0_22, %c0_23, %c0_24] : memref<1x1x256xf32, #tpu.memory_space<vmem>>, vector<1x1x256xf32>
    %42 = vector.shape_cast %41 : vector<1x1x256xf32> to vector<1x256xf32>
    %43 = vector.shape_cast %40 : vector<1x256xf32> to vector<1x1x256xf32>
    tpu.vector_store %arg7[%c0_22, %c0_23, %c0_24], %43 {strides = array<i32>} : memref<1x1x256xf32, #tpu.memory_space<vmem>>, vector<1x1x256xf32>,
    return
  }
  func.func @transform_0(%arg0: i32) -> (i32, i32) {
    %c0_i32 = arith.constant 0 : i32
    %c0_i32_0 = arith.constant 0 : i32
    return %arg0, %c0_i32 : i32, i32
  }
  func.func @transform_1(%arg0: i32) -> (i32, i32) {
    %c0_i32 = arith.constant 0 : i32
    %c0_i32_0 = arith.constant 0 : i32
    %c0_i32_1 = arith.constant 0 : i32
    return %c0_i32, %c0_i32_0 : i32, i32
  }
  func.func @transform_2(%arg0: i32) -> (i32, i32) {
    %c0_i32 = arith.constant 0 : i32
    %c0_i32_0 = arith.constant 0 : i32
    %c0_i32_1 = arith.constant 0 : i32
    return %c0_i32, %c0_i32_0 : i32, i32
  }
  func.func @transform_3(%arg0: i32) -> (i32, i32) {
    %c0_i32 = arith.constant 0 : i32
    %c0_i32_0 = arith.constant 0 : i32
    %c0_i32_1 = arith.constant 0 : i32
    return %c0_i32, %c0_i32_0 : i32, i32
  }
  func.func @transform_4(%arg0: i32) -> (i32, i32) {
    %c0_i32 = arith.constant 0 : i32
    %c0_i32_0 = arith.constant 0 : i32
    %c0_i32_1 = arith.constant 0 : i32
    return %c0_i32, %c0_i32_0 : i32, i32
  }
  func.func @transform_5(%arg0: i32) -> (i32, i32) {
    %c0_i32 = arith.constant 0 : i32
    %c0_i32_0 = arith.constant 0 : i32
    %c0_i32_1 = arith.constant 0 : i32
    return %c0_i32, %c0_i32_0 : i32, i32
  }
  func.func @transform_6(%arg0: i32) -> (i32, i32, i32) {
    %c0_i32 = arith.constant 0 : i32
    %c0_i32_0 = arith.constant 0 : i32
    %c0_i32_1 = arith.constant 0 : i32
    return %arg0, %c0_i32, %c0_i32_0 : i32, i32, i32
  }
}

</mosaic_0001>

<llo_original>
// kernel: tpu_custom_call.1
$region0: #{tpu_custom_call.1}
  #allocation0 [shape = 'u32[]', space=smem, size = 0x4, offset = 0x4, fixed_abs, tag = 'smem constant byte address 0x4 - core index']
  #allocation1 [shape = 'u32[144,128]{1,0:T(1,128)}', space=vmem, size = 0x12000, scoped, tag = 'internal scratch']
  %s0 = inlined_call_operand.vmem [shape: f32[512,32], index: 0, kind: input, shape index: {}]
  %s1 = inlined_call_operand.vmem [shape: bf16[32,128], index: 1, kind: input, shape index: {}]
  %s2 = inlined_call_operand.vmem [shape: bf16[128,128], index: 2, kind: input, shape index: {}]
  %s3 = inlined_call_operand.vmem [shape: bf16[128,128], index: 3, kind: input, shape index: {}]
  %s4 = inlined_call_operand.vmem [shape: bf16[1,128], index: 4, kind: input, shape index: {}]
  %s5 = inlined_call_operand.vmem [shape: f32[8,128], index: 5, kind: input, shape index: {}]
  %s6 = inlined_call_operand.hbm [shape: f32[2,1,256], index: 6, kind: output, shape index: {}]
  %s7 = sld [smem:[#allocation0]]
  $region57: #{tpu_custom_call.1} parent=0
    _
  %s9 = ssub.s32 1, %s7
  %s10 = scalar_select 0, %s9, %s7
  $region1: #{tpu_custom_call.1} parent=0
    #allocation2 [shape = 'u8[2048]{0}', space=vmem, size = 0x800, scoped, tag = 'output window, operand 0']
    #allocation3 [shape = 's32[2]{0}', space=sflag, size = 0x8, scoped, tag = 'scoped memory for tpu_custom_call.1']
    %11 = vsyncpa [#allocation3], 0
    %s12 = scalar_lea.sflag [#allocation3], 1
    %13 = vsyncpa %s12, 0
    loop: start=0, step=1, limit=4
    $region2: #{tpu_custom_call.1} parent=1 // loop_pre_header
      _
    $region3: #{tpu_custom_call.1} parent=1 // loop_header
      %s15 = sphi 0, %s19
      %p16 = scmp.ge.s32.totalorder %s15, 4
      %s25 = sphi 0, %s27
      %s28 = sphi 0, %s25
      %s29 = sphi 0, %s28
      %s45 = sphi 0, %s29
      %s49 = sphi 0, %s49
      %s51 = sphi 0, %s49
      %s52 = sphi 0, %s51
      %s66 = sphi 0, %s52
      %s70 = sphi 0, %s70
      %s72 = sphi 0, %s70
      %s73 = sphi 0, %s72
      %s87 = sphi 0, %s73
      %s91 = sphi 0, %s91
      %s93 = sphi 0, %s91
      %s94 = sphi 0, %s93
      %s108 = sphi 0, %s94
      %s112 = sphi 0, %s112
      %s114 = sphi 0, %s112
      %s115 = sphi 0, %s114
      %s129 = sphi 0, %s115
      %s133 = sphi 0, %s133
      %s135 = sphi 0, %s133
      %s136 = sphi 0, %s135
      %s150 = sphi 0, %s136
      %s156 = sphi 0, %s158
      %s159 = sphi 0, %s156
      %s160 = sphi 0, %s159
      %s176 = sphi 0, %s160
    $region4: #{tpu_custom_call.1} parent=1 // loop_header_branch
      %18 = sbr.rel (%p16) target = $region8
    $region5: #{tpu_custom_call.1} parent=1 // loop_body
      %s20 = ssub.s32 %s15, 1
      %s21 = ssub.s32 %s15, 2
      %s22 = sadd.s32 %s15, 1
      %s23 = ssub.s32 %s15, %s22
      %p24 = scmp.eq.s32.totalorder %s23, 0
      %s26 = sadd.s32 %s25, 1
      %s27 = scalar_select %p24, %s25, %s26
      %p30 = pneg %p24
      %p31 = scmp.eq.s32.totalorder %s15, 1
      %p32 = por %p30, %p31
      %p33 = scmp.ne.s32.totalorder %s25, %s28
      %p34 = scmp.eq.s32.totalorder %s15, 0
      %p35 = por %p33, %p34
      %p36 = scmp.ne.s32.totalorder %s25, %s28
      %p37 = scmp.eq.s32.totalorder %s20, 1
      %p38 = por %p36, %p37
      %p39 = scmp.ne.s32.totalorder %s28, %s29
      %p40 = scmp.eq.s32.totalorder %s20, 0
      %p41 = por %p39, %p40
      %p42 = scmp.ne.s32.totalorder %s28, %s29
      %p43 = scmp.eq.s32.totalorder %s21, 1
      %p44 = por %p42, %p43
      %p46 = scmp.ne.s32.totalorder %s29, %s45
      %p47 = scmp.eq.s32.totalorder %s21, 0
      %p48 = por %p46, %p47
      %s50 = sadd.s32 %s49, 1
      %p53 = scmp.eq.s32.totalorder %s15, 1
      %p54 = scmp.ne.s32.totalorder %s49, %s51
      %p55 = scmp.eq.s32.totalorder %s15, 0
      %p56 = por %p54, %p55
      %p57 = scmp.ne.s32.totalorder %s49, %s51
      %p58 = scmp.eq.s32.totalorder %s20, 1
      %p59 = por %p57, %p58
      %p60 = scmp.ne.s32.totalorder %s51, %s52
      %p61 = scmp.eq.s32.totalorder %s20, 0
      %p62 = por %p60, %p61
      %p63 = scmp.ne.s32.totalorder %s51, %s52
      %p64 = scmp.eq.s32.totalorder %s21, 1
      %p65 = por %p63, %p64
      %p67 = scmp.ne.s32.totalorder %s52, %s66
      %p68 = scmp.eq.s32.totalorder %s21, 0
      %p69 = por %p67, %p68
      %s71 = sadd.s32 %s70, 1
      %p74 = scmp.eq.s32.totalorder %s15, 1
      %p75 = scmp.ne.s32.totalorder %s70, %s72
      %p76 = scmp.eq.s32.totalorder %s15, 0
      %p77 = por %p75, %p76
      %p78 = scmp.ne.s32.totalorder %s70, %s72
      %p79 = scmp.eq.s32.totalorder %s20, 1
      %p80 = por %p78, %p79
      %p81 = scmp.ne.s32.totalorder %s72, %s73
      %p82 = scmp.eq.s32.totalorder %s20, 0
      %p83 = por %p81, %p82
      %p84 = scmp.ne.s32.totalorder %s72, %s73
      %p85 = scmp.eq.s32.totalorder %s21, 1
      %p86 = por %p84, %p85
      %p88 = scmp.ne.s32.totalorder %s73, %s87
      %p89 = scmp.eq.s32.totalorder %s21, 0
      %p90 = por %p88, %p89
      %s92 = sadd.s32 %s91, 1
      %p95 = scmp.eq.s32.totalorder %s15, 1
      %p96 = scmp.ne.s32.totalorder %s91, %s93
      %p97 = scmp.eq.s32.totalorder %s15, 0
      %p98 = por %p96, %p97
      %p99 = scmp.ne.s32.totalorder %s91, %s93
      %p100 = scmp.eq.s32.totalorder %s20, 1
      %p101 = por %p99, %p100
      %p102 = scmp.ne.s32.totalorder %s93, %s94
      %p103 = scmp.eq.s32.totalorder %s20, 0
      %p104 = por %p102, %p103
      %p105 = scmp.ne.s32.totalorder %s93, %s94
      %p106 = scmp.eq.s32.totalorder %s21, 1
      %p107 = por %p105, %p106
      %p109 = scmp.ne.s32.totalorder %s94, %s108
      %p110 = scmp.eq.s32.totalorder %s21, 0
      %p111 = por %p109, %p110
      %s113 = sadd.s32 %s112, 1
      %p116 = scmp.eq.s32.totalorder %s15, 1
      %p117 = scmp.ne.s32.totalorder %s112, %s114
      %p118 = scmp.eq.s32.totalorder %s15, 0
      %p119 = por %p117, %p118
      %p120 = scmp.ne.s32.totalorder %s112, %s114
      %p121 = scmp.eq.s32.totalorder %s20, 1
      %p122 = por %p120, %p121
      %p123 = scmp.ne.s32.totalorder %s114, %s115
      %p124 = scmp.eq.s32.totalorder %s20, 0
      %p125 = por %p123, %p124
      %p126 = scmp.ne.s32.totalorder %s114, %s115
      %p127 = scmp.eq.s32.totalorder %s21, 1
      %p128 = por %p126, %p127
      %p130 = scmp.ne.s32.totalorder %s115, %s129
      %p131 = scmp.eq.s32.totalorder %s21, 0
      %p132 = por %p130, %p131
      %s134 = sadd.s32 %s133, 1
      %p137 = scmp.eq.s32.totalorder %s15, 1
      %p138 = scmp.ne.s32.totalorder %s133, %s135
      %p139 = scmp.eq.s32.totalorder %s15, 0
      %p140 = por %p138, %p139
      %p141 = scmp.ne.s32.totalorder %s133, %s135
      %p142 = scmp.eq.s32.totalorder %s20, 1
      %p143 = por %p141, %p142
      %p144 = scmp.ne.s32.totalorder %s135, %s136
      %p145 = scmp.eq.s32.totalorder %s20, 0
      %p146 = por %p144, %p145
      %p147 = scmp.ne.s32.totalorder %s135, %s136
      %p148 = scmp.eq.s32.totalorder %s21, 1
      %p149 = por %p147, %p148
      %p151 = scmp.ne.s32.totalorder %s136, %s150
      %p152 = scmp.eq.s32.totalorder %s21, 0
      %p153 = por %p151, %p152
      %s154 = ssub.s32 %s15, %s22
      %p155 = scmp.eq.s32.totalorder %s154, 0
      %s157 = sadd.s32 %s156, 1
      %s158 = scalar_select %p155, %s156, %s157
      %p161 = pneg %p155
      %p162 = scmp.eq.s32.totalorder %s15, 1
      %p163 = por %p161, %p162
      %p164 = scmp.ne.s32.totalorder %s156, %s159
      %p165 = scmp.eq.s32.totalorder %s15, 0
      %p166 = por %p164, %p165
      %p167 = scmp.ne.s32.totalorder %s156, %s159
      %p168 = scmp.eq.s32.totalorder %s20, 1
      %p169 = por %p167, %p168
      %p170 = scmp.ne.s32.totalorder %s159, %s160
      %p171 = scmp.eq.s32.totalorder %s20, 0
      %p172 = por %p170, %p171
      %p173 = scmp.ne.s32.totalorder %s159, %s160
      %p174 = scmp.eq.s32.totalorder %s21, 1
      %p175 = por %p173, %p174
      %p177 = scmp.ne.s32.totalorder %s160, %s176
      %p178 = scmp.eq.s32.totalorder %s21, 0
      %p179 = por %p177, %p178
      %p180 = scmp.le.s32.totalorder 1, %s15
      %p181 = scmp.lt.s32.totalorder %s15, 3
      %p182 = pnand %p180, %p181
      %p183 = pneg %p182
      // Predicated region
      $region9: #{tpu_custom_call.1} parent=5 // pred_check
        _
      $region10: #{tpu_custom_call.1} parent=5 // pred_check_branch
        %185 = sbr.rel (%p182) target = $region12
      $region11: #{tpu_custom_call.1} parent=5 // pred_region
        %s186 = ssub.s32 %s15, 1
        // Predicated region
        $region13: #{tpu_custom_call.1} parent=11 // pred_check
          %p187 = pneg %p62
        $region14: #{tpu_custom_call.1} parent=11 // pred_check_branch
          %189 = sbr.rel (%p187) target = $region16
        $region15: #{tpu_custom_call.1} parent=11 // pred_region
          _
        $region16: #{tpu_custom_call.1} parent=11 // pred_fallthru
          _
        // Predicated region
        $region17: #{tpu_custom_call.1} parent=11 // pred_check
          %p190 = pneg %p83
        $region18: #{tpu_custom_call.1} parent=11 // pred_check_branch
          %192 = sbr.rel (%p190) target = $region20
        $region19: #{tpu_custom_call.1} parent=11 // pred_region
          _
        $region20: #{tpu_custom_call.1} parent=11 // pred_fallthru
          _
        // Predicated region
        $region21: #{tpu_custom_call.1} parent=11 // pred_check
          %p193 = pneg %p104
        $region22: #{tpu_custom_call.1} parent=11 // pred_check_branch
          %195 = sbr.rel (%p193) target = $region24
        $region23: #{tpu_custom_call.1} parent=11 // pred_region
          _
        $region24: #{tpu_custom_call.1} parent=11 // pred_fallthru
          _
        // Predicated region
        $region25: #{tpu_custom_call.1} parent=11 // pred_check
          %p196 = pneg %p125
        $region26: #{tpu_custom_call.1} parent=11 // pred_check_branch
          %198 = sbr.rel (%p196) target = $region28
        $region27: #{tpu_custom_call.1} parent=11 // pred_region
          _
        $region28: #{tpu_custom_call.1} parent=11 // pred_fallthru
          _
        // Predicated region
        $region29: #{tpu_custom_call.1} parent=11 // pred_check
          %p199 = pneg %p146
        $region30: #{tpu_custom_call.1} parent=11 // pred_check_branch
          %201 = sbr.rel (%p199) target = $region32
        $region31: #{tpu_custom_call.1} parent=11 // pred_region
          _
        $region32: #{tpu_custom_call.1} parent=11 // pred_fallthru
          _
      $region12: #{tpu_custom_call.1} parent=5 // pred_fallthru
        _
      %p202 = scmp.lt.s32.totalorder %s15, 2
      // Predicated region
      $region33: #{tpu_custom_call.1} parent=5 // pred_check
        %p203 = pneg %p202
      $region34: #{tpu_custom_call.1} parent=5 // pred_check_branch
        %205 = sbr.rel (%p203) target = $region36
      $region35: #{tpu_custom_call.1} parent=5 // pred_region
        // Predicated region
        $region37: #{tpu_custom_call.1} parent=35 // pred_check
          %p206 = pneg %p35
        $region38: #{tpu_custom_call.1} parent=35 // pred_check_branch
          %208 = sbr.rel (%p206) target = $region40
        $region39: #{tpu_custom_call.1} parent=35 // pred_region
          %s209 = smul.u32 32, %s15
          %p210 = scmp.lt.s32.totalorder %s209, 63
          %s211 = scalar_select %p210, %s209, 63
          %s212 = smul.addr %s211, 8
          %s213 = scalar_lea.vmem %s0, %s212
          %s214 = smul.u32 32, %s15
        $region40: #{tpu_custom_call.1} parent=35 // pred_fallthru
          _
      $region36: #{tpu_custom_call.1} parent=5 // pred_fallthru
        _
      %p215 = scmp.le.s32.totalorder 1, %s15
      %p216 = scmp.lt.s32.totalorder %s15, 3
      %p217 = pnand %p215, %p216
      %p218 = pneg %p217
      // Predicated region
      $region41: #{tpu_custom_call.1} parent=5 // pred_check
        _
      $region42: #{tpu_custom_call.1} parent=5 // pred_check_branch
        %220 = sbr.rel (%p217) target = $region44
      $region43: #{tpu_custom_call.1} parent=5 // pred_region
        %s221 = ssub.s32 %s15, 1
        %s222 = smul.u32 32, %s20
        %p223 = scmp.lt.s32.totalorder %s222, 63
        %s224 = scalar_select %p223, %s222, 63
        %s225 = smul.addr %s224, 8
        %s226 = scalar_lea.vmem %s0, %s225
        %p227 = pneg %p41
        %p228 = pneg %p38
        %p229 = pneg %p62
        %p230 = pneg %p59
        %p231 = pneg %p83
        %p232 = pneg %p80
        %p233 = pneg %p104
        %p234 = pneg %p101
        %p235 = pneg %p125
        %p236 = pneg %p122
        %p237 = pneg %p146
        %p238 = pneg %p143
        %p239 = pneg %p172
        %p240 = pneg %p169
        %s241 = sand.u32 %s159, 1
        %s242 = scalar_lea.sflag [#allocation3], %s241
        %s243 = sand.u32 %s159, 1
        %s244 = smul.addr %s243, 2
        %s245 = scalar_lea.vmem [#allocation2], %s244
        %s246 = smul.u32 32, %s20
        %p247 = scmp.lt.s32.totalorder %s246, 63
        %s248 = scalar_select %p247, %s246, 63
        %s249 = smul.addr %s248, 8
        %s250 = scalar_lea.vmem %s0, %s249
        %s251 = smul.u32 32, %s20
        %v253 = vld [vmem:[%s5] sm:$0x1]
        %v254 = vpack.c.bf16 %v253, %v253
        %v255 = vld [vmem:[%s5 + $0x1] sm:$0x1]
        %v256 = vpack.c.bf16 %v255, %v255
        %v257 = vld [vmem:[%s5 + $0x2] sm:$0x1]
        %v258 = vpack.c.bf16 %v257, %v257
        %v259 = vld [vmem:[%s5 + $0x3] sm:$0x1]
        %v260 = vld [vmem:[%s250] sm:$0xff]
        %v261 = vld [vmem:[%s250 + $0x8] sm:$0xff]
        %v262 = vld [vmem:[%s250 + $0x10] sm:$0xff]
        %v263 = vld [vmem:[%s250 + $0x18] sm:$0xff]
        %v264 = vld [vmem:[%s250 + $0x20] sm:$0xff]
        %v265 = vld [vmem:[%s250 + $0x28] sm:$0xff]
        %v266 = vld [vmem:[%s250 + $0x30] sm:$0xff]
        %v267 = vld [vmem:[%s250 + $0x38] sm:$0xff]
        %v268 = vld [vmem:[%s250 + $0x40] sm:$0xff]
        %v269 = vld [vmem:[%s250 + $0x48] sm:$0xff]
        %v270 = vld [vmem:[%s250 + $0x50] sm:$0xff]
        %v271 = vld [vmem:[%s250 + $0x58] sm:$0xff]
        %v272 = vld [vmem:[%s250 + $0x60] sm:$0xff]
        %v273 = vld [vmem:[%s250 + $0x68] sm:$0xff]
        %v274 = vld [vmem:[%s250 + $0x70] sm:$0xff]
        %v275 = vld [vmem:[%s250 + $0x78] sm:$0xff]
        %v276 = vld [vmem:[%s250 + $0x80] sm:$0xff]
        %v277 = vld [vmem:[%s250 + $0x88] sm:$0xff]
        %v278 = vld [vmem:[%s250 + $0x90] sm:$0xff]
        %v279 = vld [vmem:[%s250 + $0x98] sm:$0xff]
        %v280 = vld [vmem:[%s250 + $0xa0] sm:$0xff]
        %v281 = vld [vmem:[%s250 + $0xa8] sm:$0xff]
        %v282 = vld [vmem:[%s250 + $0xb0] sm:$0xff]
        %v283 = vld [vmem:[%s250 + $0xb8] sm:$0xff]
        %v284 = vld [vmem:[%s250 + $0xc0] sm:$0xff]
        %v285 = vld [vmem:[%s250 + $0xc8] sm:$0xff]
        %v286 = vld [vmem:[%s250 + $0xd0] sm:$0xff]
        %v287 = vld [vmem:[%s250 + $0xd8] sm:$0xff]
        %v288 = vld [vmem:[%s250 + $0xe0] sm:$0xff]
        %v289 = vld [vmem:[%s250 + $0xe8] sm:$0xff]
        %v290 = vld [vmem:[%s250 + $0xf0] sm:$0xff]
        %v291 = vld [vmem:[%s250 + $0xf8] sm:$0xff]
        %v292 = vpack.c.bf16 %v261, %v260
        %v293 = vpack.c.bf16 %v263, %v262
        %v294 = vpack.c.bf16 %v265, %v264
        %v295 = vpack.c.bf16 %v267, %v266
        %v296 = vpack.c.bf16 %v269, %v268
        %v297 = vpack.c.bf16 %v271, %v270
        %v298 = vpack.c.bf16 %v273, %v272
        %v299 = vpack.c.bf16 %v275, %v274
        %v300 = vpack.c.bf16 %v277, %v276
        %v301 = vpack.c.bf16 %v279, %v278
        %v302 = vpack.c.bf16 %v281, %v280
        %v303 = vpack.c.bf16 %v283, %v282
        %v304 = vpack.c.bf16 %v285, %v284
        %v305 = vpack.c.bf16 %v287, %v286
        %v306 = vpack.c.bf16 %v289, %v288
        %v307 = vpack.c.bf16 %v291, %v290
        %v308 = vld [vmem:[%s1] sm:$0xf]
        %v309 = vld [vmem:[%s1 + $0x4] sm:$0xf]
        %v310 = vld [vmem:[%s1 + $0x8] sm:$0xf]
        %v311 = vld [vmem:[%s1 + $0xc] sm:$0xf]
        %v316 = vunpack.c.l.b16 %v308
        %v317 = vunpack.c.l.b16 %v309
        %v318 = vunpack.c.l.b16 %v310
        %v319 = vunpack.c.l.b16 %v311
        %v320 = vpack.c.b16 %v317, %v316
        %v321 = vpack.c.b16 %v319, %v318
        %vm324 = vcmask 261120
        %v326 = vsel %vm324, %v292, 0
        %v329 = vsel %vm324, %v293, 0
        %v332 = vsel %vm324, %v294, 0
        %v335 = vsel %vm324, %v295, 0
        %v338 = vsel %vm324, %v296, 0
        %v341 = vsel %vm324, %v297, 0
        %v344 = vsel %vm324, %v298, 0
        %v347 = vsel %vm324, %v299, 0
        %v350 = vsel %vm324, %v300, 0
        %v353 = vsel %vm324, %v301, 0
        %v356 = vsel %vm324, %v302, 0
        %v359 = vsel %vm324, %v303, 0
        %v362 = vsel %vm324, %v304, 0
        %v365 = vsel %vm324, %v305, 0
        %v368 = vsel %vm324, %v306, 0
        %v371 = vsel %vm324, %v307, 0
        %373 = vmatprep.subr.bf16.mxu0 0
        %374 = vmatpush1.bf16.msra.mxu0 %v320
        %375 = vmatprep.subr.bf16.mxu0 0
        %376 = vmatpush1.bf16.msra.mxu0 %v321
        %377 = vmatprep.subr.bf16.mxu0 0
        %378 = vmatpush1.bf16.msra.mxu0 0
        %379 = vmatprep.subr.bf16.mxu0 0
        %380 = vmatpush1.bf16.msra.mxu0 0
        %381 = vmatprep.subr.bf16.mxu0 0
        %382 = vmatpush1.bf16.msra.mxu0 0
        %383 = vmatprep.subr.bf16.mxu0 0
        %384 = vmatpush1.bf16.msra.mxu0 0
        %385 = vmatprep.subr.bf16.mxu0 0
        %386 = vmatpush1.bf16.msra.mxu0 0
        %387 = vmatprep.subr.bf16.mxu0 0
        %388 = vmatpush1.bf16.msra.mxu0 0
        %389 = vmatprep.subr.bf16.mxu0 0
        %390 = vmatpush1.bf16.msra.mxu0 0
        %391 = vmatprep.subr.bf16.mxu0 0
        %392 = vmatpush1.bf16.msra.mxu0 0
        %393 = vmatprep.subr.bf16.mxu0 0
        %394 = vmatpush1.bf16.msra.mxu0 0
        %395 = vmatprep.subr.bf16.mxu0 0
        %396 = vmatpush1.bf16.msra.mxu0 0
        %397 = vmatprep.subr.bf16.mxu0 0
        %398 = vmatpush1.bf16.msra.mxu0 0
        %399 = vmatprep.subr.bf16.mxu0 0
        %400 = vmatpush1.bf16.msra.mxu0 0
        %401 = vmatprep.subr.bf16.mxu0 0
        %402 = vmatpush1.bf16.msra.mxu0 0
        %403 = vmatprep.subr.bf16.mxu0 0
        %404 = vmatpush1.bf16.msra.mxu0 0
        %405 = vmatprep.mubr.bf16.mxu0 0
        %406 = vmatmul.mubr.bf16.gmra.mrb[0].mxu0 %v326
        %v407 = vpop.f32.mrb[0].mxu0
        %v408 = vadd.f32 0.0, %v407
        %v409 = vpop.f32.mrb[0].mxu0
        %v410 = vpop.f32.mrb[0].mxu0
        %v411 = vadd.f32 0.0, %v410
        %v412 = vpop.f32.mrb[0].mxu0
        %413 = vmatprep.mubr.bf16.mxu0 0
        %414 = vmatmul.mubr.bf16.gmra.mrb[0].mxu0 %v329
        %v415 = vpop.f32.mrb[0].mxu0
        %v416 = vadd.f32 0.0, %v415
        %v417 = vpop.f32.mrb[0].mxu0
        %v418 = vpop.f32.mrb[0].mxu0
        %v419 = vadd.f32 0.0, %v418
        %v420 = vpop.f32.mrb[0].mxu0
        %421 = vmatprep.mubr.bf16.mxu0 0
        %422 = vmatmul.mubr.bf16.gmra.mrb[0].mxu0 %v332
        %v423 = vpop.f32.mrb[0].mxu0
        %v424 = vadd.f32 0.0, %v423
        %v425 = vpop.f32.mrb[0].mxu0
        %v426 = vpop.f32.mrb[0].mxu0
        %v427 = vadd.f32 0.0, %v426
        %v428 = vpop.f32.mrb[0].mxu0
        %429 = vmatprep.mubr.bf16.mxu0 0
        %430 = vmatmul.mubr.bf16.gmra.mrb[0].mxu0 %v335
        %v431 = vpop.f32.mrb[0].mxu0
        %v432 = vadd.f32 0.0, %v431
        %v433 = vpop.f32.mrb[0].mxu0
        %v434 = vpop.f32.mrb[0].mxu0
        %v435 = vadd.f32 0.0, %v434
        %v436 = vpop.f32.mrb[0].mxu0
        %437 = vmatprep.mubr.bf16.mxu0 0
        %438 = vmatmul.mubr.bf16.gmra.mrb[0].mxu0 %v338
        %v439 = vpop.f32.mrb[0].mxu0
        %v440 = vadd.f32 0.0, %v439
        %v441 = vpop.f32.mrb[0].mxu0
        %v442 = vpop.f32.mrb[0].mxu0
        %v443 = vadd.f32 0.0, %v442
        %v444 = vpop.f32.mrb[0].mxu0
        %445 = vmatprep.mubr.bf16.mxu0 0
        %446 = vmatmul.mubr.bf16.gmra.mrb[0].mxu0 %v341
        %v447 = vpop.f32.mrb[0].mxu0
        %v448 = vadd.f32 0.0, %v447
        %v449 = vpop.f32.mrb[0].mxu0
        %v450 = vpop.f32.mrb[0].mxu0
        %v451 = vadd.f32 0.0, %v450
        %v452 = vpop.f32.mrb[0].mxu0
        %453 = vmatprep.mubr.bf16.mxu0 0
        %454 = vmatmul.mubr.bf16.gmra.mrb[0].mxu0 %v344
        %v455 = vpop.f32.mrb[0].mxu0
        %v456 = vadd.f32 0.0, %v455
        %v457 = vpop.f32.mrb[0].mxu0
        %v458 = vpop.f32.mrb[0].mxu0
        %v459 = vadd.f32 0.0, %v458
        %v460 = vpop.f32.mrb[0].mxu0
        %461 = vmatprep.mubr.bf16.mxu0 0
        %462 = vmatmul.mubr.bf16.gmra.mrb[0].mxu0 %v347
        %v463 = vpop.f32.mrb[0].mxu0
        %v464 = vadd.f32 0.0, %v463
        %v465 = vpop.f32.mrb[0].mxu0
        %v466 = vpop.f32.mrb[0].mxu0
        %v467 = vadd.f32 0.0, %v466
        %v468 = vpop.f32.mrb[0].mxu0
        %469 = vmatprep.mubr.bf16.mxu0 0
        %470 = vmatmul.mubr.bf16.gmra.mrb[0].mxu0 %v350
        %v471 = vpop.f32.mrb[0].mxu0
        %v472 = vadd.f32 0.0, %v471
        %v473 = vpop.f32.mrb[0].mxu0
        %v474 = vpop.f32.mrb[0].mxu0
        %v475 = vadd.f32 0.0, %v474
        %v476 = vpop.f32.mrb[0].mxu0
        %477 = vmatprep.mubr.bf16.mxu0 0
        %478 = vmatmul.mubr.bf16.gmra.mrb[0].mxu0 %v353
        %v479 = vpop.f32.mrb[0].mxu0
        %v480 = vadd.f32 0.0, %v479
        %v481 = vpop.f32.mrb[0].mxu0
        %v482 = vpop.f32.mrb[0].mxu0
        %v483 = vadd.f32 0.0, %v482
        %v484 = vpop.f32.mrb[0].mxu0
        %485 = vmatprep.mubr.bf16.mxu0 0
        %486 = vmatmul.mubr.bf16.gmra.mrb[0].mxu0 %v356
        %v487 = vpop.f32.mrb[0].mxu0
        %v488 = vadd.f32 0.0, %v487
        %v489 = vpop.f32.mrb[0].mxu0
        %v490 = vpop.f32.mrb[0].mxu0
        %v491 = vadd.f32 0.0, %v490
        %v492 = vpop.f32.mrb[0].mxu0
        %493 = vmatprep.mubr.bf16.mxu0 0
        %494 = vmatmul.mubr.bf16.gmra.mrb[0].mxu0 %v359
        %v495 = vpop.f32.mrb[0].mxu0
        %v496 = vadd.f32 0.0, %v495
        %v497 = vpop.f32.mrb[0].mxu0
        %v498 = vpop.f32.mrb[0].mxu0
        %v499 = vadd.f32 0.0, %v498
        %v500 = vpop.f32.mrb[0].mxu0
        %501 = vmatprep.mubr.bf16.mxu0 0
        %502 = vmatmul.mubr.bf16.gmra.mrb[0].mxu0 %v362
        %v503 = vpop.f32.mrb[0].mxu0
        %v504 = vadd.f32 0.0, %v503
        %v505 = vpop.f32.mrb[0].mxu0
        %v506 = vpop.f32.mrb[0].mxu0
        %v507 = vadd.f32 0.0, %v506
        %v508 = vpop.f32.mrb[0].mxu0
        %509 = vmatprep.mubr.bf16.mxu0 0
        %510 = vmatmul.mubr.bf16.gmra.mrb[0].mxu0 %v365
        %v511 = vpop.f32.mrb[0].mxu0
        %v512 = vadd.f32 0.0, %v511
        %v513 = vpop.f32.mrb[0].mxu0
        %v514 = vpop.f32.mrb[0].mxu0
        %v515 = vadd.f32 0.0, %v514
        %v516 = vpop.f32.mrb[0].mxu0
        %517 = vmatprep.mubr.bf16.mxu0 0
        %518 = vmatmul.mubr.bf16.gmra.mrb[0].mxu0 %v368
        %v519 = vpop.f32.mrb[0].mxu0
        %v520 = vadd.f32 0.0, %v519
        %v521 = vpop.f32.mrb[0].mxu0
        %v522 = vpop.f32.mrb[0].mxu0
        %v523 = vadd.f32 0.0, %v522
        %v524 = vpop.f32.mrb[0].mxu0
        %525 = vmatprep.mubr.bf16.mxu0 0
        %526 = vmatmul.mubr.bf16.gmra.mrb[0].mxu0 %v371
        %v527 = vpop.f32.mrb[0].mxu0
        %v528 = vadd.f32 0.0, %v527
        %v529 = vpop.f32.mrb[0].mxu0
        %v530 = vpop.f32.mrb[0].mxu0
        %v531 = vadd.f32 0.0, %v530
        %v532 = vpop.f32.mrb[0].mxu0
        %533 = vdwg.mxu0
        %v534 = vpack.c.bf16 %v411, %v408
        %v535 = vpack.c.bf16 %v419, %v416
        %v536 = vpack.c.bf16 %v427, %v424
        %v537 = vpack.c.bf16 %v435, %v432
        %v538 = vpack.c.bf16 %v443, %v440
        %v539 = vpack.c.bf16 %v451, %v448
        %v540 = vpack.c.bf16 %v459, %v456
        %v541 = vpack.c.bf16 %v467, %v464
        %v542 = vpack.c.bf16 %v475, %v472
        %v543 = vpack.c.bf16 %v483, %v480
        %v544 = vpack.c.bf16 %v491, %v488
        %v545 = vpack.c.bf16 %v499, %v496
        %v546 = vpack.c.bf16 %v507, %v504
        %v547 = vpack.c.bf16 %v515, %v512
        %v548 = vpack.c.bf16 %v523, %v520
        %v549 = vpack.c.bf16 %v531, %v528
        %v551 = vpack.i.b16 %v254, %v254
        %v553 = vlaneseq
        %v554 = vshrl.u32 %v553, 7
        %v555 = vsub.s32 0, %v554
        %v556 = vrot.slane %v551, %v555
        %v557 = vadd.bf16 %v534, %v556
        %v558 = vadd.bf16 %v535, %v556
        %v559 = vadd.bf16 %v536, %v556
        %v560 = vadd.bf16 %v537, %v556
        %v561 = vadd.bf16 %v538, %v556
        %v562 = vadd.bf16 %v539, %v556
        %v563 = vadd.bf16 %v540, %v556
        %v564 = vadd.bf16 %v541, %v556
        %v565 = vadd.bf16 %v542, %v556
        %v566 = vadd.bf16 %v543, %v556
        %v567 = vadd.bf16 %v544, %v556
        %v568 = vadd.bf16 %v545, %v556
        %v569 = vadd.bf16 %v546, %v556
        %v570 = vadd.bf16 %v547, %v556
        %v571 = vadd.bf16 %v548, %v556
        %v572 = vadd.bf16 %v549, %v556
        %v573 = vmax.bf16 %v557, 0
        %v574 = vmax.bf16 %v558, 0
        %v575 = vmax.bf16 %v559, 0
        %v576 = vmax.bf16 %v560, 0
        %v577 = vmax.bf16 %v561, 0
        %v578 = vmax.bf16 %v562, 0
        %v579 = vmax.bf16 %v563, 0
        %v580 = vmax.bf16 %v564, 0
        %v581 = vmax.bf16 %v565, 0
        %v582 = vmax.bf16 %v566, 0
        %v583 = vmax.bf16 %v567, 0
        %v584 = vmax.bf16 %v568, 0
        %v585 = vmax.bf16 %v569, 0
        %v586 = vmax.bf16 %v570, 0
        %v587 = vmax.bf16 %v571, 0
        %v588 = vmax.bf16 %v572, 0
        %v589 = vld [vmem:[%s2] sm:$0xf]
        %v590 = vld [vmem:[%s2 + $0x4] sm:$0xf]
        %v591 = vld [vmem:[%s2 + $0x8] sm:$0xf]
        %v592 = vld [vmem:[%s2 + $0xc] sm:$0xf]
        %v593 = vld [vmem:[%s2 + $0x10] sm:$0xf]
        %v594 = vld [vmem:[%s2 + $0x14] sm:$0xf]
        %v595 = vld [vmem:[%s2 + $0x18] sm:$0xf]
        %v596 = vld [vmem:[%s2 + $0x1c] sm:$0xf]
        %v597 = vld [vmem:[%s2 + $0x20] sm:$0xf]
        %v598 = vld [vmem:[%s2 + $0x24] sm:$0xf]
        %v599 = vld [vmem:[%s2 + $0x28] sm:$0xf]
        %v600 = vld [vmem:[%s2 + $0x2c] sm:$0xf]
        %v601 = vld [vmem:[%s2 + $0x30] sm:$0xf]
        %v602 = vld [vmem:[%s2 + $0x34] sm:$0xf]
        %v603 = vld [vmem:[%s2 + $0x38] sm:$0xf]
        %v604 = vld [vmem:[%s2 + $0x3c] sm:$0xf]
        %v621 = vunpack.c.l.b16 %v589
        %v622 = vunpack.c.l.b16 %v590
        %v623 = vunpack.c.l.b16 %v591
        %v624 = vunpack.c.l.b16 %v592
        %v625 = vunpack.c.l.b16 %v593
        %v626 = vunpack.c.l.b16 %v594
        %v627 = vunpack.c.l.b16 %v595
        %v628 = vunpack.c.l.b16 %v596
        %v629 = vunpack.c.l.b16 %v597
        %v630 = vunpack.c.l.b16 %v598
        %v631 = vunpack.c.l.b16 %v599
        %v632 = vunpack.c.l.b16 %v600
        %v633 = vunpack.c.l.b16 %v601
        %v634 = vunpack.c.l.b16 %v602
        %v635 = vunpack.c.l.b16 %v603
        %v636 = vunpack.c.l.b16 %v604
        %v637 = vpack.c.b16 %v622, %v621
        %v638 = vpack.c.b16 %v624, %v623
        %v639 = vpack.c.b16 %v626, %v625
        %v640 = vpack.c.b16 %v628, %v627
        %v641 = vpack.c.b16 %v630, %v629
        %v642 = vpack.c.b16 %v632, %v631
        %v643 = vpack.c.b16 %v634, %v633
        %v644 = vpack.c.b16 %v636, %v635
        %653 = vmatprep.subr.bf16.mxu0 0
        %654 = vmatpush1.bf16.msra.mxu0 %v637
        %655 = vmatprep.subr.bf16.mxu0 0
        %656 = vmatpush1.bf16.msra.mxu0 %v638
        %657 = vmatprep.subr.bf16.mxu0 0
        %658 = vmatpush1.bf16.msra.mxu0 %v639
        %659 = vmatprep.subr.bf16.mxu0 0
        %660 = vmatpush1.bf16.msra.mxu0 %v640
        %661 = vmatprep.subr.bf16.mxu0 0
        %662 = vmatpush1.bf16.msra.mxu0 %v641
        %663 = vmatprep.subr.bf16.mxu0 0
        %664 = vmatpush1.bf16.msra.mxu0 %v642
        %665 = vmatprep.subr.bf16.mxu0 0
        %666 = vmatpush1.bf16.msra.mxu0 %v643
        %667 = vmatprep.subr.bf16.mxu0 0
        %668 = vmatpush1.bf16.msra.mxu0 %v644
        %669 = vmatprep.subr.bf16.mxu0 0
        %670 = vmatpush1.bf16.msra.mxu0 0
        %671 = vmatprep.subr.bf16.mxu0 0
        %672 = vmatpush1.bf16.msra.mxu0 0
        %673 = vmatprep.subr.bf16.mxu0 0
        %674 = vmatpush1.bf16.msra.mxu0 0
        %675 = vmatprep.subr.bf16.mxu0 0
        %676 = vmatpush1.bf16.msra.mxu0 0
        %677 = vmatprep.subr.bf16.mxu0 0
        %678 = vmatpush1.bf16.msra.mxu0 0
        %679 = vmatprep.subr.bf16.mxu0 0
        %680 = vmatpush1.bf16.msra.mxu0 0
        %681 = vmatprep.subr.bf16.mxu0 0
        %682 = vmatpush1.bf16.msra.mxu0 0
        %683 = vmatprep.subr.bf16.mxu0 0
        %684 = vmatpush1.bf16.msra.mxu0 0
        %685 = vmatprep.mubr.bf16.mxu0 0
        %686 = vmatmul.mubr.bf16.gmra.mrb[0].mxu0 %v573
        %v687 = vpop.f32.mrb[0].mxu0
        %v688 = vadd.f32 0.0, %v687
        %v689 = vpop.f32.mrb[0].mxu0
        %v690 = vpop.f32.mrb[0].mxu0
        %v691 = vadd.f32 0.0, %v690
        %v692 = vpop.f32.mrb[0].mxu0
        %693 = vmatprep.mubr.bf16.mxu0 0
        %694 = vmatmul.mubr.bf16.gmra.mrb[0].mxu0 %v574
        %v695 = vpop.f32.mrb[0].mxu0
        %v696 = vadd.f32 0.0, %v695
        %v697 = vpop.f32.mrb[0].mxu0
        %v698 = vpop.f32.mrb[0].mxu0
        %v699 = vadd.f32 0.0, %v698
        %v700 = vpop.f32.mrb[0].mxu0
        %701 = vmatprep.mubr.bf16.mxu0 0
        %702 = vmatmul.mubr.bf16.gmra.mrb[0].mxu0 %v575
        %v703 = vpop.f32.mrb[0].mxu0
        %v704 = vadd.f32 0.0, %v703
        %v705 = vpop.f32.mrb[0].mxu0
        %v706 = vpop.f32.mrb[0].mxu0
        %v707 = vadd.f32 0.0, %v706
        %v708 = vpop.f32.mrb[0].mxu0
        %709 = vmatprep.mubr.bf16.mxu0 0
        %710 = vmatmul.mubr.bf16.gmra.mrb[0].mxu0 %v576
        %v711 = vpop.f32.mrb[0].mxu0
        %v712 = vadd.f32 0.0, %v711
        %v713 = vpop.f32.mrb[0].mxu0
        %v714 = vpop.f32.mrb[0].mxu0
        %v715 = vadd.f32 0.0, %v714
        %v716 = vpop.f32.mrb[0].mxu0
        %717 = vmatprep.mubr.bf16.mxu0 0
        %718 = vmatmul.mubr.bf16.gmra.mrb[0].mxu0 %v577
        %v719 = vpop.f32.mrb[0].mxu0
        %v720 = vadd.f32 0.0, %v719
        %v721 = vpop.f32.mrb[0].mxu0
        %v722 = vpop.f32.mrb[0].mxu0
        %v723 = vadd.f32 0.0, %v722
        %v724 = vpop.f32.mrb[0].mxu0
        %725 = vmatprep.mubr.bf16.mxu0 0
        %726 = vmatmul.mubr.bf16.gmra.mrb[0].mxu0 %v578
        %v727 = vpop.f32.mrb[0].mxu0
        %v728 = vadd.f32 0.0, %v727
        %v729 = vpop.f32.mrb[0].mxu0
        %v730 = vpop.f32.mrb[0].mxu0
        %v731 = vadd.f32 0.0, %v730
        %v732 = vpop.f32.mrb[0].mxu0
        %733 = vmatprep.mubr.bf16.mxu0 0
        %734 = vmatmul.mubr.bf16.gmra.mrb[0].mxu0 %v579
        %v735 = vpop.f32.mrb[0].mxu0
        %v736 = vadd.f32 0.0, %v735
        %v737 = vpop.f32.mrb[0].mxu0
        %v738 = vpop.f32.mrb[0].mxu0
        %v739 = vadd.f32 0.0, %v738
        %v740 = vpop.f32.mrb[0].mxu0
        %741 = vmatprep.mubr.bf16.mxu0 0
        %742 = vmatmul.mubr.bf16.gmra.mrb[0].mxu0 %v580
        %v743 = vpop.f32.mrb[0].mxu0
        %v744 = vadd.f32 0.0, %v743
        %v745 = vpop.f32.mrb[0].mxu0
        %v746 = vpop.f32.mrb[0].mxu0
        %v747 = vadd.f32 0.0, %v746
        %v748 = vpop.f32.mrb[0].mxu0
        %749 = vmatprep.mubr.bf16.mxu0 0
        %750 = vmatmul.mubr.bf16.gmra.mrb[0].mxu0 %v581
        %v751 = vpop.f32.mrb[0].mxu0
        %v752 = vadd.f32 0.0, %v751
        %v753 = vpop.f32.mrb[0].mxu0
        %v754 = vpop.f32.mrb[0].mxu0
        %v755 = vadd.f32 0.0, %v754
        %v756 = vpop.f32.mrb[0].mxu0
        %757 = vmatprep.mubr.bf16.mxu0 0
        %758 = vmatmul.mubr.bf16.gmra.mrb[0].mxu0 %v582
        %v759 = vpop.f32.mrb[0].mxu0
        %v760 = vadd.f32 0.0, %v759
        %v761 = vpop.f32.mrb[0].mxu0
        %v762 = vpop.f32.mrb[0].mxu0
        %v763 = vadd.f32 0.0, %v762
        %v764 = vpop.f32.mrb[0].mxu0
        %765 = vmatprep.mubr.bf16.mxu0 0
        %766 = vmatmul.mubr.bf16.gmra.mrb[0].mxu0 %v583
        %v767 = vpop.f32.mrb[0].mxu0
        %v768 = vadd.f32 0.0, %v767
        %v769 = vpop.f32.mrb[0].mxu0
        %v770 = vpop.f32.mrb[0].mxu0
        %v771 = vadd.f32 0.0, %v770
        %v772 = vpop.f32.mrb[0].mxu0
        %773 = vmatprep.mubr.bf16.mxu0 0
        %774 = vmatmul.mubr.bf16.gmra.mrb[0].mxu0 %v584
        %v775 = vpop.f32.mrb[0].mxu0
        %v776 = vadd.f32 0.0, %v775
        %v777 = vpop.f32.mrb[0].mxu0
        %v778 = vpop.f32.mrb[0].mxu0
        %v779 = vadd.f32 0.0, %v778
        %v780 = vpop.f32.mrb[0].mxu0
        %781 = vmatprep.mubr.bf16.mxu0 0
        %782 = vmatmul.mubr.bf16.gmra.mrb[0].mxu0 %v585
        %v783 = vpop.f32.mrb[0].mxu0
        %v784 = vadd.f32 0.0, %v783
        %v785 = vpop.f32.mrb[0].mxu0
        %v786 = vpop.f32.mrb[0].mxu0
        %v787 = vadd.f32 0.0, %v786
        %v788 = vpop.f32.mrb[0].mxu0
        %789 = vmatprep.mubr.bf16.mxu0 0
        %790 = vmatmul.mubr.bf16.gmra.mrb[0].mxu0 %v586
        %v791 = vpop.f32.mrb[0].mxu0
        %v792 = vadd.f32 0.0, %v791
        %v793 = vpop.f32.mrb[0].mxu0
        %v794 = vpop.f32.mrb[0].mxu0
        %v795 = vadd.f32 0.0, %v794
        %v796 = vpop.f32.mrb[0].mxu0
        %797 = vmatprep.mubr.bf16.mxu0 0
        %798 = vmatmul.mubr.bf16.gmra.mrb[0].mxu0 %v587
        %v799 = vpop.f32.mrb[0].mxu0
        %v800 = vadd.f32 0.0, %v799
        %v801 = vpop.f32.mrb[0].mxu0
        %v802 = vpop.f32.mrb[0].mxu0
        %v803 = vadd.f32 0.0, %v802
        %v804 = vpop.f32.mrb[0].mxu0
        %805 = vmatprep.mubr.bf16.mxu0 0
        %806 = vmatmul.mubr.bf16.gmra.mrb[0].mxu0 %v588
        %v807 = vpop.f32.mrb[0].mxu0
        %v808 = vadd.f32 0.0, %v807
        %v809 = vpop.f32.mrb[0].mxu0
        %v810 = vpop.f32.mrb[0].mxu0
        %v811 = vadd.f32 0.0, %v810
        %v812 = vpop.f32.mrb[0].mxu0
        %813 = vdwg.mxu0
        %v814 = vpack.c.bf16 %v691, %v688
        %v815 = vpack.c.bf16 %v699, %v696
        %v816 = vpack.c.bf16 %v707, %v704
        %v817 = vpack.c.bf16 %v715, %v712
        %v818 = vpack.c.bf16 %v723, %v720
        %v819 = vpack.c.bf16 %v731, %v728
        %v820 = vpack.c.bf16 %v739, %v736
        %v821 = vpack.c.bf16 %v747, %v744
        %v822 = vpack.c.bf16 %v755, %v752
        %v823 = vpack.c.bf16 %v763, %v760
        %v824 = vpack.c.bf16 %v771, %v768
        %v825 = vpack.c.bf16 %v779, %v776
        %v826 = vpack.c.bf16 %v787, %v784
        %v827 = vpack.c.bf16 %v795, %v792
        %v828 = vpack.c.bf16 %v803, %v800
        %v829 = vpack.c.bf16 %v811, %v808
        %v831 = vpack.i.b16 %v256, %v256
        %v833 = vlaneseq
        %v834 = vshrl.u32 %v833, 7
        %v835 = vsub.s32 0, %v834
        %v836 = vrot.slane %v831, %v835
        %v837 = vadd.bf16 %v814, %v836
        %v838 = vadd.bf16 %v815, %v836
        %v839 = vadd.bf16 %v816, %v836
        %v840 = vadd.bf16 %v817, %v836
        %v841 = vadd.bf16 %v818, %v836
        %v842 = vadd.bf16 %v819, %v836
        %v843 = vadd.bf16 %v820, %v836
        %v844 = vadd.bf16 %v821, %v836
        %v845 = vadd.bf16 %v822, %v836
        %v846 = vadd.bf16 %v823, %v836
        %v847 = vadd.bf16 %v824, %v836
        %v848 = vadd.bf16 %v825, %v836
        %v849 = vadd.bf16 %v826, %v836
        %v850 = vadd.bf16 %v827, %v836
        %v851 = vadd.bf16 %v828, %v836
        %v852 = vadd.bf16 %v829, %v836
        %v853 = vmax.bf16 %v837, 0
        %v854 = vmax.bf16 %v838, 0
        %v855 = vmax.bf16 %v839, 0
        %v856 = vmax.bf16 %v840, 0
        %v857 = vmax.bf16 %v841, 0
        %v858 = vmax.bf16 %v842, 0
        %v859 = vmax.bf16 %v843, 0
        %v860 = vmax.bf16 %v844, 0
        %v861 = vmax.bf16 %v845, 0
        %v862 = vmax.bf16 %v846, 0
        %v863 = vmax.bf16 %v847, 0
        %v864 = vmax.bf16 %v848, 0
        %v865 = vmax.bf16 %v849, 0
        %v866 = vmax.bf16 %v850, 0
        %v867 = vmax.bf16 %v851, 0
        %v868 = vmax.bf16 %v852, 0
        %v869 = vld [vmem:[%s3] sm:$0xf]
        %v870 = vld [vmem:[%s3 + $0x4] sm:$0xf]
        %v871 = vld [vmem:[%s3 + $0x8] sm:$0xf]
        %v872 = vld [vmem:[%s3 + $0xc] sm:$0xf]
        %v873 = vld [vmem:[%s3 + $0x10] sm:$0xf]
        %v874 = vld [vmem:[%s3 + $0x14] sm:$0xf]
        %v875 = vld [vmem:[%s3 + $0x18] sm:$0xf]
        %v876 = vld [vmem:[%s3 + $0x1c] sm:$0xf]
        %v877 = vld [vmem:[%s3 + $0x20] sm:$0xf]
        %v878 = vld [vmem:[%s3 + $0x24] sm:$0xf]
        %v879 = vld [vmem:[%s3 + $0x28] sm:$0xf]
        %v880 = vld [vmem:[%s3 + $0x2c] sm:$0xf]
        %v881 = vld [vmem:[%s3 + $0x30] sm:$0xf]
        %v882 = vld [vmem:[%s3 + $0x34] sm:$0xf]
        %v883 = vld [vmem:[%s3 + $0x38] sm:$0xf]
        %v884 = vld [vmem:[%s3 + $0x3c] sm:$0xf]
        %v901 = vunpack.c.l.b16 %v869
        %v902 = vunpack.c.l.b16 %v870
        %v903 = vunpack.c.l.b16 %v871
        %v904 = vunpack.c.l.b16 %v872
        %v905 = vunpack.c.l.b16 %v873
        %v906 = vunpack.c.l.b16 %v874
        %v907 = vunpack.c.l.b16 %v875
        %v908 = vunpack.c.l.b16 %v876
        %v909 = vunpack.c.l.b16 %v877
        %v910 = vunpack.c.l.b16 %v878
        %v911 = vunpack.c.l.b16 %v879
        %v912 = vunpack.c.l.b16 %v880
        %v913 = vunpack.c.l.b16 %v881
        %v914 = vunpack.c.l.b16 %v882
        %v915 = vunpack.c.l.b16 %v883
        %v916 = vunpack.c.l.b16 %v884
        %v917 = vpack.c.b16 %v902, %v901
        %v918 = vpack.c.b16 %v904, %v903
        %v919 = vpack.c.b16 %v906, %v905
        %v920 = vpack.c.b16 %v908, %v907
        %v921 = vpack.c.b16 %v910, %v909
        %v922 = vpack.c.b16 %v912, %v911
        %v923 = vpack.c.b16 %v914, %v913
        %v924 = vpack.c.b16 %v916, %v915
        %933 = vmatprep.subr.bf16.mxu0 0
        %934 = vmatpush1.bf16.msra.mxu0 %v917
        %935 = vmatprep.subr.bf16.mxu0 0
        %936 = vmatpush1.bf16.msra.mxu0 %v918
        %937 = vmatprep.subr.bf16.mxu0 0
        %938 = vmatpush1.bf16.msra.mxu0 %v919
        %939 = vmatprep.subr.bf16.mxu0 0
        %940 = vmatpush1.bf16.msra.mxu0 %v920
        %941 = vmatprep.subr.bf16.mxu0 0
        %942 = vmatpush1.bf16.msra.mxu0 %v921
        %943 = vmatprep.subr.bf16.mxu0 0
        %944 = vmatpush1.bf16.msra.mxu0 %v922
        %945 = vmatprep.subr.bf16.mxu0 0
        %946 = vmatpush1.bf16.msra.mxu0 %v923
        %947 = vmatprep.subr.bf16.mxu0 0
        %948 = vmatpush1.bf16.msra.mxu0 %v924
        %949 = vmatprep.subr.bf16.mxu0 0
        %950 = vmatpush1.bf16.msra.mxu0 0
        %951 = vmatprep.subr.bf16.mxu0 0
        %952 = vmatpush1.bf16.msra.mxu0 0
        %953 = vmatprep.subr.bf16.mxu0 0
        %954 = vmatpush1.bf16.msra.mxu0 0
        %955 = vmatprep.subr.bf16.mxu0 0
        %956 = vmatpush1.bf16.msra.mxu0 0
        %957 = vmatprep.subr.bf16.mxu0 0
        %958 = vmatpush1.bf16.msra.mxu0 0
        %959 = vmatprep.subr.bf16.mxu0 0
        %960 = vmatpush1.bf16.msra.mxu0 0
        %961 = vmatprep.subr.bf16.mxu0 0
        %962 = vmatpush1.bf16.msra.mxu0 0
        %963 = vmatprep.subr.bf16.mxu0 0
        %964 = vmatpush1.bf16.msra.mxu0 0
        %965 = vmatprep.mubr.bf16.mxu0 0
        %966 = vmatmul.mubr.bf16.gmra.mrb[0].mxu0 %v853
        %v967 = vpop.f32.mrb[0].mxu0
        %v968 = vadd.f32 0.0, %v967
        %v969 = vpop.f32.mrb[0].mxu0
        %v970 = vpop.f32.mrb[0].mxu0
        %v971 = vadd.f32 0.0, %v970
        %v972 = vpop.f32.mrb[0].mxu0
        %973 = vmatprep.mubr.bf16.mxu0 0
        %974 = vmatmul.mubr.bf16.gmra.mrb[0].mxu0 %v854
        %v975 = vpop.f32.mrb[0].mxu0
        %v976 = vadd.f32 0.0, %v975
        %v977 = vpop.f32.mrb[0].mxu0
        %v978 = vpop.f32.mrb[0].mxu0
        %v979 = vadd.f32 0.0, %v978
        %v980 = vpop.f32.mrb[0].mxu0
        %981 = vmatprep.mubr.bf16.mxu0 0
        %982 = vmatmul.mubr.bf16.gmra.mrb[0].mxu0 %v855
        %v983 = vpop.f32.mrb[0].mxu0
        %v984 = vadd.f32 0.0, %v983
        %v985 = vpop.f32.mrb[0].mxu0
        %v986 = vpop.f32.mrb[0].mxu0
        %v987 = vadd.f32 0.0, %v986
        %v988 = vpop.f32.mrb[0].mxu0
        %989 = vmatprep.mubr.bf16.mxu0 0
        %990 = vmatmul.mubr.bf16.gmra.mrb[0].mxu0 %v856
        %v991 = vpop.f32.mrb[0].mxu0
        %v992 = vadd.f32 0.0, %v991
        %v993 = vpop.f32.mrb[0].mxu0
        %v994 = vpop.f32.mrb[0].mxu0
        %v995 = vadd.f32 0.0, %v994
        %v996 = vpop.f32.mrb[0].mxu0
        %997 = vmatprep.mubr.bf16.mxu0 0
        %998 = vmatmul.mubr.bf16.gmra.mrb[0].mxu0 %v857
        %v999 = vpop.f32.mrb[0].mxu0
        %v1000 = vadd.f32 0.0, %v999
        %v1001 = vpop.f32.mrb[0].mxu0
        %v1002 = vpop.f32.mrb[0].mxu0
        %v1003 = vadd.f32 0.0, %v1002
        %v1004 = vpop.f32.mrb[0].mxu0
        %1005 = vmatprep.mubr.bf16.mxu0 0
        %1006 = vmatmul.mubr.bf16.gmra.mrb[0].mxu0 %v858
        %v1007 = vpop.f32.mrb[0].mxu0
        %v1008 = vadd.f32 0.0, %v1007
        %v1009 = vpop.f32.mrb[0].mxu0
        %v1010 = vpop.f32.mrb[0].mxu0
        %v1011 = vadd.f32 0.0, %v1010
        %v1012 = vpop.f32.mrb[0].mxu0
        %1013 = vmatprep.mubr.bf16.mxu0 0
        %1014 = vmatmul.mubr.bf16.gmra.mrb[0].mxu0 %v859
        %v1015 = vpop.f32.mrb[0].mxu0
        %v1016 = vadd.f32 0.0, %v1015
        %v1017 = vpop.f32.mrb[0].mxu0
        %v1018 = vpop.f32.mrb[0].mxu0
        %v1019 = vadd.f32 0.0, %v1018
        %v1020 = vpop.f32.mrb[0].mxu0
        %1021 = vmatprep.mubr.bf16.mxu0 0
        %1022 = vmatmul.mubr.bf16.gmra.mrb[0].mxu0 %v860
        %v1023 = vpop.f32.mrb[0].mxu0
        %v1024 = vadd.f32 0.0, %v1023
        %v1025 = vpop.f32.mrb[0].mxu0
        %v1026 = vpop.f32.mrb[0].mxu0
        %v1027 = vadd.f32 0.0, %v1026
        %v1028 = vpop.f32.mrb[0].mxu0
        %1029 = vmatprep.mubr.bf16.mxu0 0
        %1030 = vmatmul.mubr.bf16.gmra.mrb[0].mxu0 %v861
        %v1031 = vpop.f32.mrb[0].mxu0
        %v1032 = vadd.f32 0.0, %v1031
        %v1033 = vpop.f32.mrb[0].mxu0
        %v1034 = vpop.f32.mrb[0].mxu0
        %v1035 = vadd.f32 0.0, %v1034
        %v1036 = vpop.f32.mrb[0].mxu0
        %1037 = vmatprep.mubr.bf16.mxu0 0
        %1038 = vmatmul.mubr.bf16.gmra.mrb[0].mxu0 %v862
        %v1039 = vpop.f32.mrb[0].mxu0
        %v1040 = vadd.f32 0.0, %v1039
        %v1041 = vpop.f32.mrb[0].mxu0
        %v1042 = vpop.f32.mrb[0].mxu0
        %v1043 = vadd.f32 0.0, %v1042
        %v1044 = vpop.f32.mrb[0].mxu0
        %1045 = vmatprep.mubr.bf16.mxu0 0
        %1046 = vmatmul.mubr.bf16.gmra.mrb[0].mxu0 %v863
        %v1047 = vpop.f32.mrb[0].mxu0
        %v1048 = vadd.f32 0.0, %v1047
        %v1049 = vpop.f32.mrb[0].mxu0
        %v1050 = vpop.f32.mrb[0].mxu0
        %v1051 = vadd.f32 0.0, %v1050
        %v1052 = vpop.f32.mrb[0].mxu0
        %1053 = vmatprep.mubr.bf16.mxu0 0
        %1054 = vmatmul.mubr.bf16.gmra.mrb[0].mxu0 %v864
        %v1055 = vpop.f32.mrb[0].mxu0
        %v1056 = vadd.f32 0.0, %v1055
        %v1057 = vpop.f32.mrb[0].mxu0
        %v1058 = vpop.f32.mrb[0].mxu0
        %v1059 = vadd.f32 0.0, %v1058
        %v1060 = vpop.f32.mrb[0].mxu0
        %1061 = vmatprep.mubr.bf16.mxu0 0
        %1062 = vmatmul.mubr.bf16.gmra.mrb[0].mxu0 %v865
        %v1063 = vpop.f32.mrb[0].mxu0
        %v1064 = vadd.f32 0.0, %v1063
        %v1065 = vpop.f32.mrb[0].mxu0
        %v1066 = vpop.f32.mrb[0].mxu0
        %v1067 = vadd.f32 0.0, %v1066
        %v1068 = vpop.f32.mrb[0].mxu0
        %1069 = vmatprep.mubr.bf16.mxu0 0
        %1070 = vmatmul.mubr.bf16.gmra.mrb[0].mxu0 %v866
        %v1071 = vpop.f32.mrb[0].mxu0
        %v1072 = vadd.f32 0.0, %v1071
        %v1073 = vpop.f32.mrb[0].mxu0
        %v1074 = vpop.f32.mrb[0].mxu0
        %v1075 = vadd.f32 0.0, %v1074
        %v1076 = vpop.f32.mrb[0].mxu0
        %1077 = vmatprep.mubr.bf16.mxu0 0
        %1078 = vmatmul.mubr.bf16.gmra.mrb[0].mxu0 %v867
        %v1079 = vpop.f32.mrb[0].mxu0
        %v1080 = vadd.f32 0.0, %v1079
        %v1081 = vpop.f32.mrb[0].mxu0
        %v1082 = vpop.f32.mrb[0].mxu0
        %v1083 = vadd.f32 0.0, %v1082
        %v1084 = vpop.f32.mrb[0].mxu0
        %1085 = vmatprep.mubr.bf16.mxu0 0
        %1086 = vmatmul.mubr.bf16.gmra.mrb[0].mxu0 %v868
        %v1087 = vpop.f32.mrb[0].mxu0
        %v1088 = vadd.f32 0.0, %v1087
        %v1089 = vpop.f32.mrb[0].mxu0
        %v1090 = vpop.f32.mrb[0].mxu0
        %v1091 = vadd.f32 0.0, %v1090
        %v1092 = vpop.f32.mrb[0].mxu0
        %1093 = vdwg.mxu0
        %v1094 = vpack.c.bf16 %v971, %v968
        %v1095 = vpack.c.bf16 %v979, %v976
        %v1096 = vpack.c.bf16 %v987, %v984
        %v1097 = vpack.c.bf16 %v995, %v992
        %v1098 = vpack.c.bf16 %v1003, %v1000
        %v1099 = vpack.c.bf16 %v1011, %v1008
        %v1100 = vpack.c.bf16 %v1019, %v1016
        %v1101 = vpack.c.bf16 %v1027, %v1024
        %v1102 = vpack.c.bf16 %v1035, %v1032
        %v1103 = vpack.c.bf16 %v1043, %v1040
        %v1104 = vpack.c.bf16 %v1051, %v1048
        %v1105 = vpack.c.bf16 %v1059, %v1056
        %v1106 = vpack.c.bf16 %v1067, %v1064
        %v1107 = vpack.c.bf16 %v1075, %v1072
        %v1108 = vpack.c.bf16 %v1083, %v1080
        %v1109 = vpack.c.bf16 %v1091, %v1088
        %v1111 = vpack.i.b16 %v258, %v258
        %v1113 = vlaneseq
        %v1114 = vshrl.u32 %v1113, 7
        %v1115 = vsub.s32 0, %v1114
        %v1116 = vrot.slane %v1111, %v1115
        %v1117 = vadd.bf16 %v1094, %v1116
        %v1118 = vadd.bf16 %v1095, %v1116
        %v1119 = vadd.bf16 %v1096, %v1116
        %v1120 = vadd.bf16 %v1097, %v1116
        %v1121 = vadd.bf16 %v1098, %v1116
        %v1122 = vadd.bf16 %v1099, %v1116
        %v1123 = vadd.bf16 %v1100, %v1116
        %v1124 = vadd.bf16 %v1101, %v1116
        %v1125 = vadd.bf16 %v1102, %v1116
        %v1126 = vadd.bf16 %v1103, %v1116
        %v1127 = vadd.bf16 %v1104, %v1116
        %v1128 = vadd.bf16 %v1105, %v1116
        %v1129 = vadd.bf16 %v1106, %v1116
        %v1130 = vadd.bf16 %v1107, %v1116
        %v1131 = vadd.bf16 %v1108, %v1116
        %v1132 = vadd.bf16 %v1109, %v1116
        %v1133 = vmax.bf16 %v1117, 0
        %v1134 = vmax.bf16 %v1118, 0
        %v1135 = vmax.bf16 %v1119, 0
        %v1136 = vmax.bf16 %v1120, 0
        %v1137 = vmax.bf16 %v1121, 0
        %v1138 = vmax.bf16 %v1122, 0
        %v1139 = vmax.bf16 %v1123, 0
        %v1140 = vmax.bf16 %v1124, 0
        %v1141 = vmax.bf16 %v1125, 0
        %v1142 = vmax.bf16 %v1126, 0
        %v1143 = vmax.bf16 %v1127, 0
        %v1144 = vmax.bf16 %v1128, 0
        %v1145 = vmax.bf16 %v1129, 0
        %v1146 = vmax.bf16 %v1130, 0
        %v1147 = vmax.bf16 %v1131, 0
        %v1148 = vmax.bf16 %v1132, 0
        %v1149 = vld [vmem:[%s4] sm:$0x1]
        %1151 = vset.pattern.permute.xlu0 0
        %1152 = vperm.xlu0 %1151, %v259
        %v1153 = vpop.permute.xlu0 %1152
        %1155 = vmatprep.subr.bf16.mxu0 0
        %1156 = vmatpush1.bf16.xpose.msra.mxu0 %v1133
        %1157 = vmatprep.subr.bf16.mxu0 0
        %1158 = vmatpush1.bf16.xpose.msra.mxu0 %v1134
        %1159 = vmatprep.subr.bf16.mxu0 0
        %1160 = vmatpush1.bf16.xpose.msra.mxu0 %v1135
        %1161 = vmatprep.subr.bf16.mxu0 0
        %1162 = vmatpush1.bf16.xpose.msra.mxu0 %v1136
        %1163 = vmatprep.subr.bf16.mxu0 0
        %1164 = vmatpush1.bf16.xpose.msra.mxu0 %v1137
        %1165 = vmatprep.subr.bf16.mxu0 0
        %1166 = vmatpush1.bf16.xpose.msra.mxu0 %v1138
        %1167 = vmatprep.subr.bf16.mxu0 0
        %1168 = vmatpush1.bf16.xpose.msra.mxu0 %v1139
        %1169 = vmatprep.subr.bf16.mxu0 0
        %1170 = vmatpush1.bf16.xpose.msra.mxu0 %v1140
        %1171 = vmatprep.subr.bf16.mxu0 0
        %1172 = vmatpush1.bf16.xpose.msra.mxu0 %v1141
        %1173 = vmatprep.subr.bf16.mxu0 0
        %1174 = vmatpush1.bf16.xpose.msra.mxu0 %v1142
        %1175 = vmatprep.subr.bf16.mxu0 0
        %1176 = vmatpush1.bf16.xpose.msra.mxu0 %v1143
        %1177 = vmatprep.subr.bf16.mxu0 0
        %1178 = vmatpush1.bf16.xpose.msra.mxu0 %v1144
        %1179 = vmatprep.subr.bf16.mxu0 0
        %1180 = vmatpush1.bf16.xpose.msra.mxu0 %v1145
        %1181 = vmatprep.subr.bf16.mxu0 0
        %1182 = vmatpush1.bf16.xpose.msra.mxu0 %v1146
        %1183 = vmatprep.subr.bf16.mxu0 0
        %1184 = vmatpush1.bf16.xpose.msra.mxu0 %v1147
        %1185 = vmatprep.subr.bf16.mxu0 0
        %1186 = vmatpush1.bf16.xpose.msra.mxu0 %v1148
        %1187 = vmatprep.mubr.bf16.mxu0 0
        %1188 = vmatmul.mubr.bf16.gmra.mrb[0].mxu0 %v1149
        %v1189 = vpop.f32.mrb[0].mxu0
        %v1190 = vadd.f32 %v1153, %v1189
        %v1191 = vpop.f32.mrb[0].mxu0
        %v1192 = vadd.f32 %v1153, %v1191
        %v1193 = vpop.f32.mrb[0].mxu0
        %v1194 = vpop.f32.mrb[0].mxu0
        %1195 = vdwg.mxu0
        %v1196 = vsub.f32 0.0, %v1190
        %v1197 = vsub.f32 0.0, %v1192
        %v1198 = vmul.f32 %v1196, 1.442695
        %v1199 = vpow.pop %v1198
        %v1200 = vmul.f32 %v1197, 1.442695
        %v1201 = vpow.pop %v1200
        %v1202 = vadd.f32 %v1199, 1.0
        %v1203 = vadd.f32 %v1201, 1.0
        %v1204 = vrcp.pop %v1202
        %v1205 = vrcp.pop %v1203
        %v1208 = vcombine.low %v1204, %v1205
        %v1210 = vunpack.c.l.s4 1966171168
        %v1211 = vunpack.c.0.s8 %v1210
        %v1212 = vlaneseq
        %v1213 = vshrl.u32 %v1212, 7
        %v1214 = vsub.s32 %v1211, %v1213
        %v1215 = vrot.slane %v1208, %v1214
        %v1217 = vunpack.c.l.s4 1966171168
        %v1218 = vunpack.c.0.s8 %v1217
        %v1219 = vlaneseq
        %v1220 = vshrl.u32 %v1219, 7
        %v1221 = vsub.s32 %v1218, %v1220
        %v1222 = vrot.slane %v1215, %v1221
        %v1224 = vlaneseq
        %vm1225 = vcmp.ge.s32.totalorder %v1224, 0
        %vm1226 = vcmp.lt.s32.totalorder %v1224, 256
        %vm1227 = vmand %vm1225, %vm1226
        %1228 = vst.msk [vmem:[%s245] sm:$0x3] %vm1227, %v1222
        %s1229 = sand.u32 %s159, 1
        %s1230 = scalar_lea.sflag [#allocation3], %s1229
        %s1231 = sand.u32 %s159, 1
        %s1232 = smul.addr %s1231, 2
        %s1233 = scalar_lea.vmem [#allocation2], %s1232
        // Predicated region
        $region45: #{tpu_custom_call.1} parent=43 // pred_check
          %p1234 = pneg %p169
        $region46: #{tpu_custom_call.1} parent=43 // pred_check_branch
          %1236 = sbr.rel (%p1234) target = $region48
        $region47: #{tpu_custom_call.1} parent=43 // pred_region
          %s1238 = ssub.s32 32, 32
          %1239 = vsyncadd %s1230, %s1238
          %s1240 = smul.addr %s20, 2
          %s1241 = smul.addr %s1240, 16
          %s1242 = scalar_lea.hbm %s6, %s1241
          %s1244 = sshll.u32 %s1233, 4
          %s1245 = int_to_ptr.vmem [resolvable:$true] %s1244
          %1247 = dma.vmem_to_hbm [thread:$0]  %s1245, 32, %s1242, %s1230
        $region48: #{tpu_custom_call.1} parent=43 // pred_fallthru
          _
      $region44: #{tpu_custom_call.1} parent=5 // pred_fallthru
        _
      %p1248 = scmp.le.s32.totalorder 2, %s15
      // Predicated region
      $region49: #{tpu_custom_call.1} parent=5 // pred_check
        %p1249 = pneg %p1248
      $region50: #{tpu_custom_call.1} parent=5 // pred_check_branch
        %1251 = sbr.rel (%p1249) target = $region52
      $region51: #{tpu_custom_call.1} parent=5 // pred_region
        %s1252 = ssub.s32 %s15, 2
        // Predicated region
        $region53: #{tpu_custom_call.1} parent=51 // pred_check
          %p1253 = pneg %p175
        $region54: #{tpu_custom_call.1} parent=51 // pred_check_branch
          %1255 = sbr.rel (%p1253) target = $region56
        $region55: #{tpu_custom_call.1} parent=51 // pred_region
          %s1256 = sand.u32 %s160, 1
          %s1257 = scalar_lea.sflag [#allocation3], %s1256
          %s1258 = sand.u32 %s160, 1
          %s1259 = smul.addr %s1258, 2
          %s1260 = scalar_lea.vmem [#allocation2], %s1259
          %1261 = dma.done %s1257, 32
        $region56: #{tpu_custom_call.1} parent=51 // pred_fallthru
          _
      $region52: #{tpu_custom_call.1} parent=5 // pred_fallthru
        _
    $region6: #{tpu_custom_call.1} parent=1 // loop_footer
      %s19 = sadd.s32 1, %s15
    $region7: #{tpu_custom_call.1} parent=1 // loop_footer_branch
      %14 = sbr.rel target = $region3
    $region8: #{tpu_custom_call.1} parent=1 // loop_exit
      _
    %1262 = vsyncpa [#allocation3], 1
    %s1263 = scalar_lea.sflag [#allocation3], 1
    %1264 = vsyncpa %s1263, 1

</llo_original>
